<compile_context>
chip_gen: v6e
topology: v6e:2x2x1
jax: 0.10.0
libtpu: 0.0.40
codegen_flags: <defaults>
</compile_context>

<pallas_src>
import jax
import jax.numpy as jnp
from jax.experimental import pallas as pl
from jax.experimental.pallas import tpu as pltpu


def _linear_kernel(x_ref, w_ref, b_ref, o_ref):
    # One MXU pass over the full K dimension; f32 accumulation regardless of
    # input dtype; bias added in f32 on the VPU; downcast only at the store.
    acc = jnp.dot(x_ref[...], w_ref[...], preferred_element_type=jnp.float32)
    o_ref[...] = (acc + b_ref[...].astype(jnp.float32)).astype(o_ref.dtype)


def _round_up(x, m):
    return ((x + m - 1) // m) * m


def proposal_encoder_forward(x, w_t, b, *, tm=512):
    """y = x @ w_t + b  as a Pallas TPU kernel.

    x   : [M, K]  float32 or bfloat16
    w_t : [K, N]  same dtype as x  (transposed PyTorch Linear weight, weight.T)
    b   : [N]     float32 (or same dtype as x)
    tm  : max rows per grid step (only M is tiled; K and N stay untiled).
    """
    M, K = x.shape
    K2, N = w_t.shape
    assert K == K2, "weight / input feature mismatch"

    b2 = b.reshape(1, N)

    # Tile only the batch dimension. No whole-array padding: tm_eff is a
    # multiple of 8 (sublane constraint on the BlockSpec), the grid is
    # cdiv(M, tm_eff), and Pallas handles the ragged final tile (reads of the
    # out-of-range rows are garbage but their output rows are never written).
    tm_eff = min(tm, _round_up(M, 8))
    m_tiles = pl.cdiv(M, tm_eff)

    x_bytes = M * K * jnp.dtype(x.dtype).itemsize
    w_bytes = K * N * jnp.dtype(w_t.dtype).itemsize
    b_bytes = N * jnp.dtype(b.dtype).itemsize
    y_bytes = M * N * jnp.dtype(x.dtype).itemsize
    cost = pl.CostEstimate(
        flops=2 * M * K * N,
        transcendentals=0,
        bytes_accessed=x_bytes + w_bytes + b_bytes + y_bytes,
    )

    return pl.pallas_call(
        _linear_kernel,
        out_shape=jax.ShapeDtypeStruct((M, N), x.dtype),
        grid_spec=pltpu.PrefetchScalarGridSpec(
            num_scalar_prefetch=0,
            grid=(m_tiles,),
            in_specs=[
                pl.BlockSpec((tm_eff, K), lambda i: (i, 0)),  # x tile (full K)
                pl.BlockSpec((K, N), lambda i: (0, 0)),       # W resident (fetched once)
                pl.BlockSpec((1, N), lambda i: (0, 0)),       # bias resident
            ],
            out_specs=pl.BlockSpec((tm_eff, N), lambda i: (i, 0)),
        ),
        compiler_params=pltpu.CompilerParams(
            dimension_semantics=("parallel",),
        ),
        cost_estimate=cost,
    )(x, w_t, b2)


if __name__ == "__main__":
    ndf1, ndf2 = 1024, 64   # module defaults: Linear(1024, 64)
    batch = 8               # small batch of proposal features

    key = jax.random.PRNGKey(0)
    kx, kw, kb, kx2, kx3 = jax.random.split(key, 5)

    # Deterministic synthetic parameters (PyTorch stores weight as [out, in]).
    w = jax.random.normal(kw, (ndf2, ndf1), dtype=jnp.float32) * 0.02
    b = jax.random.normal(kb, (ndf2,), dtype=jnp.float32) * 0.01
    x = jax.random.normal(kx, (batch, ndf1), dtype=jnp.float32)

    # 1) Single-block f32 path (batch=8)
    y = jax.block_until_ready(proposal_encoder_forward(x, w.T, b))
    y_ref = x @ w.T + b
    assert y.shape == (batch, ndf2)
    assert jnp.allclose(y, y_ref, atol=1e-4, rtol=1e-4)

    # 2) Ragged single tile (batch=50, not a multiple of 8): no pad/slice copies.
    x2 = jax.random.normal(kx2, (50, ndf1), dtype=jnp.float32)
    y2 = jax.block_until_ready(proposal_encoder_forward(x2, w.T, b))
    y2_ref = x2 @ w.T + b
    assert y2.shape == (50, ndf2)
    assert jnp.allclose(y2, y2_ref, atol=1e-4, rtol=1e-4)

    # 3) Multi-tile grid with a ragged final tile (batch=300, tm=128 -> 3 tiles,
    #    last tile only 44 valid rows): exercises partial-block write masking.
    x3 = jax.random.normal(kx3, (300, ndf1), dtype=jnp.float32)
    y3 = jax.block_until_ready(proposal_encoder_forward(x3, w.T, b, tm=128))
    y3_ref = x3 @ w.T + b
    assert y3.shape == (300, ndf2)
    assert jnp.allclose(y3, y3_ref, atol=1e-4, rtol=1e-4)

    # 4) bf16 inputs (halves HBM bytes; f32 accumulation + f32 bias inside).
    x_bf = x3.astype(jnp.bfloat16)
    w_bf = w.T.astype(jnp.bfloat16)
    y4 = jax.block_until_ready(proposal_encoder_forward(x_bf, w_bf, b, tm=128))
    y4_ref = (x_bf.astype(jnp.float32) @ w_bf.astype(jnp.float32) + b)
    assert y4.dtype == jnp.bfloat16
    assert jnp.allclose(y4.astype(jnp.float32), y4_ref, atol=2e-2, rtol=2e-2)

    print("KERNEL_OK")
</pallas_src>

<mosaic_0001>
module attributes {stable_mosaic.version = 11 : i64} {
  func.func @_linear_kernel(%arg0: i32, %arg1: memref<8x1024xf32, #tpu.memory_space<vmem>>, %arg2: memref<1024x64xf32, #tpu.memory_space<vmem>>, %arg3: memref<1x64xf32, #tpu.memory_space<vmem>>, %arg4: memref<8x64xf32, #tpu.memory_space<vmem>>) attributes {dimension_semantics = [#tpu.dimension_semantics<parallel>], iteration_bounds = array<i64: 1>, scalar_prefetch = 0 : i64, scratch_operands = 0 : i64, tpu.core_type = #tpu.core_type<tc>, window_params = [{transform_indices = @transform_0, window_bounds = array<i64: 8, 1024>}, {pipeline_mode = #tpu.pipeline_mode<synchronous>, transform_indices = @transform_1, window_bounds = array<i64: 1024, 64>}, {pipeline_mode = #tpu.pipeline_mode<synchronous>, transform_indices = @transform_2, window_bounds = array<i64: 1, 64>}, {transform_indices = @transform_3, window_bounds = array<i64: 8, 64>}]} {
    %c0 = arith.constant 0 : index
    %c0_0 = arith.constant 0 : index
    %0 = vector.load %arg1[%c0, %c0_0] : memref<8x1024xf32, #tpu.memory_space<vmem>>, vector<8x1024xf32>
    %c0_1 = arith.constant 0 : index
    %c0_2 = arith.constant 0 : index
    %1 = vector.load %arg2[%c0_1, %c0_2] : memref<1024x64xf32, #tpu.memory_space<vmem>>, vector<1024x64xf32>
    %cst = arith.constant dense<0.000000e+00> : vector<8x64xf32>
    %2 = tpu.matmul %0, %1, %cst {dimension_numbers = #tpu.dot_dimension_numbers<[1], [0], [0], [1], [0, 0, 1, 1], [], []>} : vector<8x1024xf32>, vector<1024x64xf32>, vector<8x64xf32> -> vector<8x64xf32>
    %c0_3 = arith.constant 0 : index
    %c0_4 = arith.constant 0 : index
    %3 = vector.load %arg3[%c0_3, %c0_4] : memref<1x64xf32, #tpu.memory_space<vmem>>, vector<1x64xf32>
    %4 = vector.broadcast %3 : vector<1x64xf32> to vector<8x64xf32>
    %5 = arith.addf %2, %4 : vector<8x64xf32>
    %c0_5 = arith.constant 0 : index
    %c0_6 = arith.constant 0 : index
    %6 = vector.load %arg4[%c0_5, %c0_6] : memref<8x64xf32, #tpu.memory_space<vmem>>, vector<8x64xf32>
    tpu.vector_store %arg4[%c0_5, %c0_6], %5 {strides = array<i32>} : memref<8x64xf32, #tpu.memory_space<vmem>>, vector<8x64xf32>,
    return
  }
  func.func @transform_0(%arg0: i32) -> (i32, i32) {
    %c0_i32 = arith.constant 0 : i32
    %c0_i32_0 = arith.constant 0 : i32
    return %arg0, %c0_i32 : i32, i32
  }
  func.func @transform_1(%arg0: i32) -> (i32, i32) {
    %c0_i32 = arith.constant 0 : i32
    %c0_i32_0 = arith.constant 0 : i32
    %c0_i32_1 = arith.constant 0 : i32
    return %c0_i32, %c0_i32_0 : i32, i32
  }
  func.func @transform_2(%arg0: i32) -> (i32, i32) {
    %c0_i32 = arith.constant 0 : i32
    %c0_i32_0 = arith.constant 0 : i32
    %c0_i32_1 = arith.constant 0 : i32
    return %c0_i32, %c0_i32_0 : i32, i32
  }
  func.func @transform_3(%arg0: i32) -> (i32, i32) {
    %c0_i32 = arith.constant 0 : i32
    %c0_i32_0 = arith.constant 0 : i32
    return %arg0, %c0_i32 : i32, i32
  }
}

</mosaic_0001>

<llo_original>
// kernel: tpu_custom_call.1
$region0: #{tpu_custom_call.1}
  #allocation0 [shape = 'u32[]', space=smem, size = 0x4, offset = 0x4, fixed_abs, tag = 'smem constant byte address 0x4 - core index']
  #allocation1 [shape = 'u32[144,128]{1,0:T(1,128)}', space=vmem, size = 0x12000, scoped, tag = 'internal scratch']
  %s0 = inlined_call_operand.vmem [shape: f32[8,1024], index: 0, kind: input, shape index: {}]
  %s1 = inlined_call_operand.vmem [shape: f32[1024,64], index: 1, kind: input, shape index: {}]
  %s2 = inlined_call_operand.vmem [shape: f32[1,64], index: 2, kind: input, shape index: {}]
  %s3 = inlined_call_operand.hbm [shape: f32[8,64], index: 3, kind: output, shape index: {}]
  %s4 = sld [smem:[#allocation0]]
  $region22: #{tpu_custom_call.1} parent=0
    _
  %s6 = ssub.s32 1, %s4
  %s7 = scalar_select 0, %s6, %s4
  $region1: #{tpu_custom_call.1} parent=0
    #allocation2 [shape = 'u8[4096]{0}', space=vmem, size = 0x1000, scoped, tag = 'output window, operand 0, single buffered']
    #allocation3 [shape = 's32[1]{0}', space=sflag, size = 0x4, scoped, tag = 'scoped memory for tpu_custom_call.1']
    %8 = vsyncpa [#allocation3], 0
    // Predicated region
    $region2: #{tpu_custom_call.1} parent=1 // pred_check
      _
    $region3: #{tpu_custom_call.1} parent=1 // pred_check_branch
      %10 = sbr.rel (0) target = $region5
    $region4: #{tpu_custom_call.1} parent=1 // pred_region
      _
    $region5: #{tpu_custom_call.1} parent=1 // pred_fallthru
      _
    // Predicated region
    $region6: #{tpu_custom_call.1} parent=1 // pred_check
      _
    $region7: #{tpu_custom_call.1} parent=1 // pred_check_branch
      %12 = sbr.rel (0) target = $region9
    $region8: #{tpu_custom_call.1} parent=1 // pred_region
      _
    $region9: #{tpu_custom_call.1} parent=1 // pred_fallthru
      _
    // Predicated region
    $region10: #{tpu_custom_call.1} parent=1 // pred_check
      _
    $region11: #{tpu_custom_call.1} parent=1 // pred_check_branch
      %14 = sbr.rel (0) target = $region13
    $region12: #{tpu_custom_call.1} parent=1 // pred_region
      _
    $region13: #{tpu_custom_call.1} parent=1 // pred_fallthru
      _
    %v15 = vld [vmem:[%s0] sm:$0xff]
    %v16 = vld [vmem:[%s0 + $0x8] sm:$0xff]
    %v17 = vld [vmem:[%s0 + $0x10] sm:$0xff]
    %v18 = vld [vmem:[%s0 + $0x18] sm:$0xff]
    %v19 = vld [vmem:[%s0 + $0x20] sm:$0xff]
    %v20 = vld [vmem:[%s0 + $0x28] sm:$0xff]
    %v21 = vld [vmem:[%s0 + $0x30] sm:$0xff]
    %v22 = vld [vmem:[%s0 + $0x38] sm:$0xff]
    %v23 = vld [vmem:[%s1] sm:$0xff]
    %v24 = vld [vmem:[%s1 + $0x8] sm:$0xff]
    %v25 = vld [vmem:[%s1 + $0x10] sm:$0xff]
    %v26 = vld [vmem:[%s1 + $0x18] sm:$0xff]
    %v27 = vld [vmem:[%s1 + $0x20] sm:$0xff]
    %v28 = vld [vmem:[%s1 + $0x28] sm:$0xff]
    %v29 = vld [vmem:[%s1 + $0x30] sm:$0xff]
    %v30 = vld [vmem:[%s1 + $0x38] sm:$0xff]
    %v31 = vld [vmem:[%s1 + $0x40] sm:$0xff]
    %v32 = vld [vmem:[%s1 + $0x48] sm:$0xff]
    %v33 = vld [vmem:[%s1 + $0x50] sm:$0xff]
    %v34 = vld [vmem:[%s1 + $0x58] sm:$0xff]
    %v35 = vld [vmem:[%s1 + $0x60] sm:$0xff]
    %v36 = vld [vmem:[%s1 + $0x68] sm:$0xff]
    %v37 = vld [vmem:[%s1 + $0x70] sm:$0xff]
    %v38 = vld [vmem:[%s1 + $0x78] sm:$0xff]
    %v39 = vld [vmem:[%s1 + $0x80] sm:$0xff]
    %v40 = vld [vmem:[%s1 + $0x88] sm:$0xff]
    %v41 = vld [vmem:[%s1 + $0x90] sm:$0xff]
    %v42 = vld [vmem:[%s1 + $0x98] sm:$0xff]
    %v43 = vld [vmem:[%s1 + $0xa0] sm:$0xff]
    %v44 = vld [vmem:[%s1 + $0xa8] sm:$0xff]
    %v45 = vld [vmem:[%s1 + $0xb0] sm:$0xff]
    %v46 = vld [vmem:[%s1 + $0xb8] sm:$0xff]
    %v47 = vld [vmem:[%s1 + $0xc0] sm:$0xff]
    %v48 = vld [vmem:[%s1 + $0xc8] sm:$0xff]
    %v49 = vld [vmem:[%s1 + $0xd0] sm:$0xff]
    %v50 = vld [vmem:[%s1 + $0xd8] sm:$0xff]
    %v51 = vld [vmem:[%s1 + $0xe0] sm:$0xff]
    %v52 = vld [vmem:[%s1 + $0xe8] sm:$0xff]
    %v53 = vld [vmem:[%s1 + $0xf0] sm:$0xff]
    %v54 = vld [vmem:[%s1 + $0xf8] sm:$0xff]
    %v55 = vld [vmem:[%s1 + $0x100] sm:$0xff]
    %v56 = vld [vmem:[%s1 + $0x108] sm:$0xff]
    %v57 = vld [vmem:[%s1 + $0x110] sm:$0xff]
    %v58 = vld [vmem:[%s1 + $0x118] sm:$0xff]
    %v59 = vld [vmem:[%s1 + $0x120] sm:$0xff]
    %v60 = vld [vmem:[%s1 + $0x128] sm:$0xff]
    %v61 = vld [vmem:[%s1 + $0x130] sm:$0xff]
    %v62 = vld [vmem:[%s1 + $0x138] sm:$0xff]
    %v63 = vld [vmem:[%s1 + $0x140] sm:$0xff]
    %v64 = vld [vmem:[%s1 + $0x148] sm:$0xff]
    %v65 = vld [vmem:[%s1 + $0x150] sm:$0xff]
    %v66 = vld [vmem:[%s1 + $0x158] sm:$0xff]
    %v67 = vld [vmem:[%s1 + $0x160] sm:$0xff]
    %v68 = vld [vmem:[%s1 + $0x168] sm:$0xff]
    %v69 = vld [vmem:[%s1 + $0x170] sm:$0xff]
    %v70 = vld [vmem:[%s1 + $0x178] sm:$0xff]
    %v71 = vld [vmem:[%s1 + $0x180] sm:$0xff]
    %v72 = vld [vmem:[%s1 + $0x188] sm:$0xff]
    %v73 = vld [vmem:[%s1 + $0x190] sm:$0xff]
    %v74 = vld [vmem:[%s1 + $0x198] sm:$0xff]
    %v75 = vld [vmem:[%s1 + $0x1a0] sm:$0xff]
    %v76 = vld [vmem:[%s1 + $0x1a8] sm:$0xff]
    %v77 = vld [vmem:[%s1 + $0x1b0] sm:$0xff]
    %v78 = vld [vmem:[%s1 + $0x1b8] sm:$0xff]
    %v79 = vld [vmem:[%s1 + $0x1c0] sm:$0xff]
    %v80 = vld [vmem:[%s1 + $0x1c8] sm:$0xff]
    %v81 = vld [vmem:[%s1 + $0x1d0] sm:$0xff]
    %v82 = vld [vmem:[%s1 + $0x1d8] sm:$0xff]
    %v83 = vld [vmem:[%s1 + $0x1e0] sm:$0xff]
    %v84 = vld [vmem:[%s1 + $0x1e8] sm:$0xff]
    %v85 = vld [vmem:[%s1 + $0x1f0] sm:$0xff]
    %v86 = vld [vmem:[%s1 + $0x1f8] sm:$0xff]
    %v87 = vld [vmem:[%s1 + $0x200] sm:$0xff]
    %v88 = vld [vmem:[%s1 + $0x208] sm:$0xff]
    %v89 = vld [vmem:[%s1 + $0x210] sm:$0xff]
    %v90 = vld [vmem:[%s1 + $0x218] sm:$0xff]
    %v91 = vld [vmem:[%s1 + $0x220] sm:$0xff]
    %v92 = vld [vmem:[%s1 + $0x228] sm:$0xff]
    %v93 = vld [vmem:[%s1 + $0x230] sm:$0xff]
    %v94 = vld [vmem:[%s1 + $0x238] sm:$0xff]
    %v95 = vld [vmem:[%s1 + $0x240] sm:$0xff]
    %v96 = vld [vmem:[%s1 + $0x248] sm:$0xff]
    %v97 = vld [vmem:[%s1 + $0x250] sm:$0xff]
    %v98 = vld [vmem:[%s1 + $0x258] sm:$0xff]
    %v99 = vld [vmem:[%s1 + $0x260] sm:$0xff]
    %v100 = vld [vmem:[%s1 + $0x268] sm:$0xff]
    %v101 = vld [vmem:[%s1 + $0x270] sm:$0xff]
    %v102 = vld [vmem:[%s1 + $0x278] sm:$0xff]
    %v103 = vld [vmem:[%s1 + $0x280] sm:$0xff]
    %v104 = vld [vmem:[%s1 + $0x288] sm:$0xff]
    %v105 = vld [vmem:[%s1 + $0x290] sm:$0xff]
    %v106 = vld [vmem:[%s1 + $0x298] sm:$0xff]
    %v107 = vld [vmem:[%s1 + $0x2a0] sm:$0xff]
    %v108 = vld [vmem:[%s1 + $0x2a8] sm:$0xff]
    %v109 = vld [vmem:[%s1 + $0x2b0] sm:$0xff]
    %v110 = vld [vmem:[%s1 + $0x2b8] sm:$0xff]
    %v111 = vld [vmem:[%s1 + $0x2c0] sm:$0xff]
    %v112 = vld [vmem:[%s1 + $0x2c8] sm:$0xff]
    %v113 = vld [vmem:[%s1 + $0x2d0] sm:$0xff]
    %v114 = vld [vmem:[%s1 + $0x2d8] sm:$0xff]
    %v115 = vld [vmem:[%s1 + $0x2e0] sm:$0xff]
    %v116 = vld [vmem:[%s1 + $0x2e8] sm:$0xff]
    %v117 = vld [vmem:[%s1 + $0x2f0] sm:$0xff]
    %v118 = vld [vmem:[%s1 + $0x2f8] sm:$0xff]
    %v119 = vld [vmem:[%s1 + $0x300] sm:$0xff]
    %v120 = vld [vmem:[%s1 + $0x308] sm:$0xff]
    %v121 = vld [vmem:[%s1 + $0x310] sm:$0xff]
    %v122 = vld [vmem:[%s1 + $0x318] sm:$0xff]
    %v123 = vld [vmem:[%s1 + $0x320] sm:$0xff]
    %v124 = vld [vmem:[%s1 + $0x328] sm:$0xff]
    %v125 = vld [vmem:[%s1 + $0x330] sm:$0xff]
    %v126 = vld [vmem:[%s1 + $0x338] sm:$0xff]
    %v127 = vld [vmem:[%s1 + $0x340] sm:$0xff]
    %v128 = vld [vmem:[%s1 + $0x348] sm:$0xff]
    %v129 = vld [vmem:[%s1 + $0x350] sm:$0xff]
    %v130 = vld [vmem:[%s1 + $0x358] sm:$0xff]
    %v131 = vld [vmem:[%s1 + $0x360] sm:$0xff]
    %v132 = vld [vmem:[%s1 + $0x368] sm:$0xff]
    %v133 = vld [vmem:[%s1 + $0x370] sm:$0xff]
    %v134 = vld [vmem:[%s1 + $0x378] sm:$0xff]
    %v135 = vld [vmem:[%s1 + $0x380] sm:$0xff]
    %v136 = vld [vmem:[%s1 + $0x388] sm:$0xff]
    %v137 = vld [vmem:[%s1 + $0x390] sm:$0xff]
    %v138 = vld [vmem:[%s1 + $0x398] sm:$0xff]
    %v139 = vld [vmem:[%s1 + $0x3a0] sm:$0xff]
    %v140 = vld [vmem:[%s1 + $0x3a8] sm:$0xff]
    %v141 = vld [vmem:[%s1 + $0x3b0] sm:$0xff]
    %v142 = vld [vmem:[%s1 + $0x3b8] sm:$0xff]
    %v143 = vld [vmem:[%s1 + $0x3c0] sm:$0xff]
    %v144 = vld [vmem:[%s1 + $0x3c8] sm:$0xff]
    %v145 = vld [vmem:[%s1 + $0x3d0] sm:$0xff]
    %v146 = vld [vmem:[%s1 + $0x3d8] sm:$0xff]
    %v147 = vld [vmem:[%s1 + $0x3e0] sm:$0xff]
    %v148 = vld [vmem:[%s1 + $0x3e8] sm:$0xff]
    %v149 = vld [vmem:[%s1 + $0x3f0] sm:$0xff]
    %v150 = vld [vmem:[%s1 + $0x3f8] sm:$0xff]
    %v151 = vld [vmem:[%s2] sm:$0x1]
    %v153 = vlaneseq
    %v154 = vshrl.u32 %v153, 7
    %v155 = vsub.s32 0, %v154
    %v156 = vrot.slane %v151, %v155
    %158 = vmatprep.subr.mxu0 0.0
    %159 = vmatpush1.msra.mxu0 %v38
    %160 = vmatprep.subr.mxu0 0.0
    %161 = vmatpush1.msra.mxu0 %v37
    %162 = vmatprep.subr.mxu0 0.0
    %163 = vmatpush1.msra.mxu0 %v36
    %164 = vmatprep.subr.mxu0 0.0
    %165 = vmatpush1.msra.mxu0 %v35
    %166 = vmatprep.subr.mxu0 0.0
    %167 = vmatpush1.msra.mxu0 %v34
    %168 = vmatprep.subr.mxu0 0.0
    %169 = vmatpush1.msra.mxu0 %v33
    %170 = vmatprep.subr.mxu0 0.0
    %171 = vmatpush1.msra.mxu0 %v32
    %172 = vmatprep.subr.mxu0 0.0
    %173 = vmatpush1.msra.mxu0 %v31
    %174 = vmatprep.subr.mxu0 0.0
    %175 = vmatpush1.msra.mxu0 %v30
    %176 = vmatprep.subr.mxu0 0.0
    %177 = vmatpush1.msra.mxu0 %v29
    %178 = vmatprep.subr.mxu0 0.0
    %179 = vmatpush1.msra.mxu0 %v28
    %180 = vmatprep.subr.mxu0 0.0
    %181 = vmatpush1.msra.mxu0 %v27
    %182 = vmatprep.subr.mxu0 0.0
    %183 = vmatpush1.msra.mxu0 %v26
    %184 = vmatprep.subr.mxu0 0.0
    %185 = vmatpush1.msra.mxu0 %v25
    %186 = vmatprep.subr.mxu0 0.0
    %187 = vmatpush1.msra.mxu0 %v24
    %188 = vmatprep.subr.mxu0 0.0
    %189 = vmatpush1.msra.mxu0 %v23
    %190 = vmatprep.subr.mxu0 0.0
    %191 = vmatpush2.msra.mxu0 %v54
    %192 = vmatprep.subr.mxu0 0.0
    %193 = vmatpush2.msra.mxu0 %v53
    %194 = vmatprep.subr.mxu0 0.0
    %195 = vmatpush2.msra.mxu0 %v52
    %196 = vmatprep.subr.mxu0 0.0
    %197 = vmatpush2.msra.mxu0 %v51
    %198 = vmatprep.subr.mxu0 0.0
    %199 = vmatpush2.msra.mxu0 %v50
    %200 = vmatprep.subr.mxu0 0.0
    %201 = vmatpush2.msra.mxu0 %v49
    %202 = vmatprep.subr.mxu0 0.0
    %203 = vmatpush2.msra.mxu0 %v48
    %204 = vmatprep.subr.mxu0 0.0
    %205 = vmatpush2.msra.mxu0 %v47
    %206 = vmatprep.subr.mxu0 0.0
    %207 = vmatpush2.msra.mxu0 %v46
    %208 = vmatprep.subr.mxu0 0.0
    %209 = vmatpush2.msra.mxu0 %v45
    %210 = vmatprep.subr.mxu0 0.0
    %211 = vmatpush2.msra.mxu0 %v44
    %212 = vmatprep.subr.mxu0 0.0
    %213 = vmatpush2.msra.mxu0 %v43
    %214 = vmatprep.subr.mxu0 0.0
    %215 = vmatpush2.msra.mxu0 %v42
    %216 = vmatprep.subr.mxu0 0.0
    %217 = vmatpush2.msra.mxu0 %v41
    %218 = vmatprep.subr.mxu0 0.0
    %219 = vmatpush2.msra.mxu0 %v40
    %220 = vmatprep.subr.mxu0 0.0
    %221 = vmatpush2.msra.mxu0 %v39
    %222 = vmatprep.mubr.f32.mxu0 %v16
    %223 = vmatmul.mubr.f32.gmra.mxu0 %v15
    %v224 = vpop.f32.mrf.mxu0
    %v225 = vadd.f32 %v156, %v224
    %v226 = vpop.f32.mrf.mxu0
    %227 = vdwg.mxu0
    %228 = vmatprep.subr.mxu0 0.0
    %229 = vmatpush1.msra.mxu0 %v70
    %230 = vmatprep.subr.mxu0 0.0
    %231 = vmatpush1.msra.mxu0 %v69
    %232 = vmatprep.subr.mxu0 0.0
    %233 = vmatpush1.msra.mxu0 %v68
    %234 = vmatprep.subr.mxu0 0.0
    %235 = vmatpush1.msra.mxu0 %v67
    %236 = vmatprep.subr.mxu0 0.0
    %237 = vmatpush1.msra.mxu0 %v66
    %238 = vmatprep.subr.mxu0 0.0
    %239 = vmatpush1.msra.mxu0 %v65
    %240 = vmatprep.subr.mxu0 0.0
    %241 = vmatpush1.msra.mxu0 %v64
    %242 = vmatprep.subr.mxu0 0.0
    %243 = vmatpush1.msra.mxu0 %v63
    %244 = vmatprep.subr.mxu0 0.0
    %245 = vmatpush1.msra.mxu0 %v62
    %246 = vmatprep.subr.mxu0 0.0
    %247 = vmatpush1.msra.mxu0 %v61
    %248 = vmatprep.subr.mxu0 0.0
    %249 = vmatpush1.msra.mxu0 %v60
    %250 = vmatprep.subr.mxu0 0.0
    %251 = vmatpush1.msra.mxu0 %v59
    %252 = vmatprep.subr.mxu0 0.0
    %253 = vmatpush1.msra.mxu0 %v58
    %254 = vmatprep.subr.mxu0 0.0
    %255 = vmatpush1.msra.mxu0 %v57
    %256 = vmatprep.subr.mxu0 0.0
    %257 = vmatpush1.msra.mxu0 %v56
    %258 = vmatprep.subr.mxu0 0.0
    %259 = vmatpush1.msra.mxu0 %v55
    %260 = vmatprep.subr.mxu0 0.0
    %261 = vmatpush2.msra.mxu0 %v86
    %262 = vmatprep.subr.mxu0 0.0
    %263 = vmatpush2.msra.mxu0 %v85
    %264 = vmatprep.subr.mxu0 0.0
    %265 = vmatpush2.msra.mxu0 %v84
    %266 = vmatprep.subr.mxu0 0.0
    %267 = vmatpush2.msra.mxu0 %v83
    %268 = vmatprep.subr.mxu0 0.0
    %269 = vmatpush2.msra.mxu0 %v82
    %270 = vmatprep.subr.mxu0 0.0
    %271 = vmatpush2.msra.mxu0 %v81
    %272 = vmatprep.subr.mxu0 0.0
    %273 = vmatpush2.msra.mxu0 %v80
    %274 = vmatprep.subr.mxu0 0.0
    %275 = vmatpush2.msra.mxu0 %v79
    %276 = vmatprep.subr.mxu0 0.0
    %277 = vmatpush2.msra.mxu0 %v78
    %278 = vmatprep.subr.mxu0 0.0
    %279 = vmatpush2.msra.mxu0 %v77
    %280 = vmatprep.subr.mxu0 0.0
    %281 = vmatpush2.msra.mxu0 %v76
    %282 = vmatprep.subr.mxu0 0.0
    %283 = vmatpush2.msra.mxu0 %v75
    %284 = vmatprep.subr.mxu0 0.0
    %285 = vmatpush2.msra.mxu0 %v74
    %286 = vmatprep.subr.mxu0 0.0
    %287 = vmatpush2.msra.mxu0 %v73
    %288 = vmatprep.subr.mxu0 0.0
    %289 = vmatpush2.msra.mxu0 %v72
    %290 = vmatprep.subr.mxu0 0.0
    %291 = vmatpush2.msra.mxu0 %v71
    %292 = vmatprep.mubr.f32.mxu0 %v18
    %293 = vmatmul.mubr.f32.gmra.mxu0 %v17
    %v294 = vpop.f32.mrf.mxu0
    %v295 = vadd.f32 %v225, %v294
    %v296 = vpop.f32.mrf.mxu0
    %297 = vdwg.mxu0
    %298 = vmatprep.subr.mxu0 0.0
    %299 = vmatpush1.msra.mxu0 %v102
    %300 = vmatprep.subr.mxu0 0.0
    %301 = vmatpush1.msra.mxu0 %v101
    %302 = vmatprep.subr.mxu0 0.0
    %303 = vmatpush1.msra.mxu0 %v100
    %304 = vmatprep.subr.mxu0 0.0
    %305 = vmatpush1.msra.mxu0 %v99
    %306 = vmatprep.subr.mxu0 0.0
    %307 = vmatpush1.msra.mxu0 %v98
    %308 = vmatprep.subr.mxu0 0.0
    %309 = vmatpush1.msra.mxu0 %v97
    %310 = vmatprep.subr.mxu0 0.0
    %311 = vmatpush1.msra.mxu0 %v96
    %312 = vmatprep.subr.mxu0 0.0
    %313 = vmatpush1.msra.mxu0 %v95
    %314 = vmatprep.subr.mxu0 0.0
    %315 = vmatpush1.msra.mxu0 %v94
    %316 = vmatprep.subr.mxu0 0.0
    %317 = vmatpush1.msra.mxu0 %v93
    %318 = vmatprep.subr.mxu0 0.0
    %319 = vmatpush1.msra.mxu0 %v92
    %320 = vmatprep.subr.mxu0 0.0
    %321 = vmatpush1.msra.mxu0 %v91
    %322 = vmatprep.subr.mxu0 0.0
    %323 = vmatpush1.msra.mxu0 %v90
    %324 = vmatprep.subr.mxu0 0.0
    %325 = vmatpush1.msra.mxu0 %v89
    %326 = vmatprep.subr.mxu0 0.0
    %327 = vmatpush1.msra.mxu0 %v88
    %328 = vmatprep.subr.mxu0 0.0
    %329 = vmatpush1.msra.mxu0 %v87
    %330 = vmatprep.subr.mxu0 0.0
    %331 = vmatpush2.msra.mxu0 %v118
    %332 = vmatprep.subr.mxu0 0.0
    %333 = vmatpush2.msra.mxu0 %v117
    %334 = vmatprep.subr.mxu0 0.0
    %335 = vmatpush2.msra.mxu0 %v116
    %336 = vmatprep.subr.mxu0 0.0
    %337 = vmatpush2.msra.mxu0 %v115
    %338 = vmatprep.subr.mxu0 0.0
    %339 = vmatpush2.msra.mxu0 %v114
    %340 = vmatprep.subr.mxu0 0.0
    %341 = vmatpush2.msra.mxu0 %v113
    %342 = vmatprep.subr.mxu0 0.0
    %343 = vmatpush2.msra.mxu0 %v112
    %344 = vmatprep.subr.mxu0 0.0
    %345 = vmatpush2.msra.mxu0 %v111
    %346 = vmatprep.subr.mxu0 0.0
    %347 = vmatpush2.msra.mxu0 %v110
    %348 = vmatprep.subr.mxu0 0.0
    %349 = vmatpush2.msra.mxu0 %v109
    %350 = vmatprep.subr.mxu0 0.0
    %351 = vmatpush2.msra.mxu0 %v108
    %352 = vmatprep.subr.mxu0 0.0
    %353 = vmatpush2.msra.mxu0 %v107
    %354 = vmatprep.subr.mxu0 0.0
    %355 = vmatpush2.msra.mxu0 %v106
    %356 = vmatprep.subr.mxu0 0.0
    %357 = vmatpush2.msra.mxu0 %v105
    %358 = vmatprep.subr.mxu0 0.0
    %359 = vmatpush2.msra.mxu0 %v104
    %360 = vmatprep.subr.mxu0 0.0
    %361 = vmatpush2.msra.mxu0 %v103
    %362 = vmatprep.mubr.f32.mxu0 %v20
    %363 = vmatmul.mubr.f32.gmra.mxu0 %v19
    %v364 = vpop.f32.mrf.mxu0
    %v365 = vadd.f32 %v295, %v364
    %v366 = vpop.f32.mrf.mxu0
    %367 = vdwg.mxu0
    %368 = vmatprep.subr.mxu0 0.0
    %369 = vmatpush1.msra.mxu0 %v134
    %370 = vmatprep.subr.mxu0 0.0
    %371 = vmatpush1.msra.mxu0 %v133
    %372 = vmatprep.subr.mxu0 0.0
    %373 = vmatpush1.msra.mxu0 %v132
    %374 = vmatprep.subr.mxu0 0.0
    %375 = vmatpush1.msra.mxu0 %v131
    %376 = vmatprep.subr.mxu0 0.0
    %377 = vmatpush1.msra.mxu0 %v130
    %378 = vmatprep.subr.mxu0 0.0
    %379 = vmatpush1.msra.mxu0 %v129
    %380 = vmatprep.subr.mxu0 0.0
    %381 = vmatpush1.msra.mxu0 %v128
    %382 = vmatprep.subr.mxu0 0.0
    %383 = vmatpush1.msra.mxu0 %v127
    %384 = vmatprep.subr.mxu0 0.0
    %385 = vmatpush1.msra.mxu0 %v126
    %386 = vmatprep.subr.mxu0 0.0
    %387 = vmatpush1.msra.mxu0 %v125
    %388 = vmatprep.subr.mxu0 0.0
    %389 = vmatpush1.msra.mxu0 %v124
    %390 = vmatprep.subr.mxu0 0.0
    %391 = vmatpush1.msra.mxu0 %v123
    %392 = vmatprep.subr.mxu0 0.0
    %393 = vmatpush1.msra.mxu0 %v122
    %394 = vmatprep.subr.mxu0 0.0
    %395 = vmatpush1.msra.mxu0 %v121
    %396 = vmatprep.subr.mxu0 0.0
    %397 = vmatpush1.msra.mxu0 %v120
    %398 = vmatprep.subr.mxu0 0.0
    %399 = vmatpush1.msra.mxu0 %v119
    %400 = vmatprep.subr.mxu0 0.0
    %401 = vmatpush2.msra.mxu0 %v150
    %402 = vmatprep.subr.mxu0 0.0
    %403 = vmatpush2.msra.mxu0 %v149
    %404 = vmatprep.subr.mxu0 0.0
    %405 = vmatpush2.msra.mxu0 %v148
    %406 = vmatprep.subr.mxu0 0.0
    %407 = vmatpush2.msra.mxu0 %v147
    %408 = vmatprep.subr.mxu0 0.0
    %409 = vmatpush2.msra.mxu0 %v146
    %410 = vmatprep.subr.mxu0 0.0
    %411 = vmatpush2.msra.mxu0 %v145
    %412 = vmatprep.subr.mxu0 0.0
    %413 = vmatpush2.msra.mxu0 %v144
    %414 = vmatprep.subr.mxu0 0.0
    %415 = vmatpush2.msra.mxu0 %v143
    %416 = vmatprep.subr.mxu0 0.0
    %417 = vmatpush2.msra.mxu0 %v142
    %418 = vmatprep.subr.mxu0 0.0
    %419 = vmatpush2.msra.mxu0 %v141
    %420 = vmatprep.subr.mxu0 0.0
    %421 = vmatpush2.msra.mxu0 %v140
    %422 = vmatprep.subr.mxu0 0.0
    %423 = vmatpush2.msra.mxu0 %v139
    %424 = vmatprep.subr.mxu0 0.0
    %425 = vmatpush2.msra.mxu0 %v138
    %426 = vmatprep.subr.mxu0 0.0
    %427 = vmatpush2.msra.mxu0 %v137
    %428 = vmatprep.subr.mxu0 0.0
    %429 = vmatpush2.msra.mxu0 %v136
    %430 = vmatprep.subr.mxu0 0.0
    %431 = vmatpush2.msra.mxu0 %v135
    %432 = vmatprep.mubr.f32.mxu0 %v22
    %433 = vmatmul.mubr.f32.gmra.mxu0 %v21
    %v434 = vpop.f32.mrf.mxu0
    %v435 = vadd.f32 %v365, %v434
    %v436 = vpop.f32.mrf.mxu0
    %437 = vdwg.mxu0
    %vm438 = vcmask 523264
    %439 = vst.msk [vmem:[#allocation2] sm:$0xff] %vm438, %v435
    // Predicated region
    $region14: #{tpu_custom_call.1} parent=1 // pred_check
      _
    $region15: #{tpu_custom_call.1} parent=1 // pred_check_branch
      %441 = sbr.rel (0) target = $region17
    $region16: #{tpu_custom_call.1} parent=1 // pred_region
      %s443 = ssub.s32 128, 128
      %444 = vsyncadd [#allocation3], %s443
      %s446 = sshll.u32 [#allocation2], 4
      %s447 = int_to_ptr.vmem [resolvable:$true] %s446
      %449 = dma.vmem_to_hbm [thread:$0]  %s447, 128, %s3, [#allocation3]
    $region17: #{tpu_custom_call.1} parent=1 // pred_fallthru
      _
    // Predicated region
    $region18: #{tpu_custom_call.1} parent=1 // pred_check
      _
    $region19: #{tpu_custom_call.1} parent=1 // pred_check_branch
      %451 = sbr.rel (0) target = $region21
    $region20: #{tpu_custom_call.1} parent=1 // pred_region
      %452 = dma.done [#allocation3], 128
    $region21: #{tpu_custom_call.1} parent=1 // pred_fallthru
      _
    %453 = vsyncpa [#allocation3], 1

</llo_original>
